<compile_context>
chip_gen: v7x
topology: tpu7x:2x2x1
jax: 0.10.0
libtpu: 0.0.40
codegen_flags: <defaults>
</compile_context>

<pallas_src>
from dataclasses import dataclass

import jax
import jax.numpy as jnp
from jax.experimental import pallas as pl
from jax.experimental.pallas import tpu as pltpu


@dataclass
class Config:
    alpha: float = 0.5
    kl_lambda_start_step: int = 100
    kl_lambda_anneal_rate: float = 0.005


def kl_lambda_annealing(current_step, start_step, anneal_rate):
    # TODO(synk): kl_lambda_annealing is not defined in the source module; using the
    # standard linear ramp  min(1, rate * max(0, step - start))  used by StockNet.
    step = jnp.asarray(current_step, jnp.float32)
    return jnp.minimum(anneal_rate * jnp.maximum(step - float(start_step), 0.0), 1.0)


def _make_joint_loss_kernel(B, T, C, BBLK, alpha, ragged):
    alpha = float(alpha)
    neg_inv_b = -1.0 / float(B)          # folded compile-time constant

    def kernel(lam_ref, nday_ref, y_tgt_ref, y_pred_ref, v_ref, kls_ref,
               yTt_ref, yT_ref, out_ref):
        lam = lam_ref[0]                                   # kl_lambda (traced scalar)

        v_aux = alpha * v_ref[...]                         # [BBLK, T]
        kls = kls_ref[...]                                 # [BBLK, T]

        # one-hot of (n_day - 1) over the T axis, integer compares.
        # NOTE: out-of-range n_day (outside [1, T]) silently zeroes the kl_T term
        # (reference take_along_axis / torch.gather would clamp or error).
        t_idx = jax.lax.broadcasted_iota(jnp.int32, (BBLK, T), 1)
        sel = (t_idx == (nday_ref[...] - 1)).astype(jnp.float32)   # [BBLK, T]

        # alpha * v * y_ * log(y)     (no eps on log(y), matching the reference)
        lik = v_aux[:, :, None] * (y_tgt_ref[...] * jnp.log(y_pred_ref[...]))
        # (alpha * v + onehot(n_day-1)) * kl_s   (scaled by kl_lambda after the sum)
        kl_terms = (v_aux + sel) * kls                     # [BBLK, T]
        # terminal likelihood at [BBLK, C] granularity
        lik_T = yTt_ref[...] * jnp.log(yT_ref[...] + 1e-7)  # [BBLK, C]

        if ragged:
            # Last block may read past the batch boundary -> mask garbage rows.
            rows = (jax.lax.broadcasted_iota(jnp.int32, (BBLK, 1), 0)
                    + pl.program_id(0) * BBLK)
            valid = rows < B                               # [BBLK, 1] bool
            lik = jnp.where(valid[:, :, None], lik, 0.0)
            kl_terms = jnp.where(valid, kl_terms, 0.0)
            lik_T = jnp.where(valid, lik_T, 0.0)

        partial = jnp.sum(lik) - lam * jnp.sum(kl_terms) + jnp.sum(lik_T)
        # loss = mean_b(-obj[b])  ->  each block contributes (-1/B) * partial.
        out_ref[...] = jnp.full((1, 8, 128), partial * neg_inv_b, jnp.float32)

    return kernel


def calculate_joint_loss(config, v_stared, y_, y, y_T, y_T_, kl_s,
                         current_step, n_day, phase, *, block_b=256):
    B, T, C = y.shape

    if phase == 'train':
        kl_lambda = kl_lambda_annealing(current_step,
                                        config.kl_lambda_start_step,
                                        config.kl_lambda_anneal_rate)
    else:
        kl_lambda = jnp.float32(1.0)
    lam = jnp.asarray(kl_lambda, jnp.float32).reshape(1)     # (1,) -> SMEM

    f32 = lambda a: jnp.asarray(a, jnp.float32)
    y_tgt = f32(y_)                                          # [B, T, C]
    y_pred = f32(y)                                          # [B, T, C]
    v = f32(v_stared)                                        # [B, T]
    kls = f32(kl_s)                                          # [B, T]
    yT_tgt = jnp.reshape(f32(y_T_), (B, C))                  # torch .squeeze() glue
    yT_pred = f32(y_T)                                       # [B, C]
    nday = jnp.reshape(jnp.asarray(n_day, jnp.int32), (B, 1))

    # Batch tiling: one block when it fits, otherwise blocks of a multiple of 8
    # rows (sublane constraint) with a masked ragged tail.
    if B <= block_b:
        bblk = B
    else:
        bblk = max(8, (min(block_b, B) // 8) * 8)
    nblk = int(pl.cdiv(B, bblk))
    ragged = (nblk * bblk) != B

    kernel = _make_joint_loss_kernel(B, T, C, bblk, config.alpha, ragged)

    cost = pl.CostEstimate(
        flops=10 * B * T * C + 6 * B * T + 3 * B * C,
        transcendentals=B * T * C + B * C,
        bytes_accessed=4 * (2 * B * T * C + 2 * B * T + 2 * B * C + B + 1)
                       + 4 * nblk * 8 * 128,
    )

    partials = pl.pallas_call(
        kernel,
        out_shape=jax.ShapeDtypeStruct((nblk, 8, 128), jnp.float32),
        grid=(nblk,),
        in_specs=[
            pl.BlockSpec(memory_space=pltpu.MemorySpace.SMEM),    # kl_lambda (1,)
            pl.BlockSpec((bblk, 1), lambda i: (i, 0)),            # n_day  int32
            pl.BlockSpec((bblk, T, C), lambda i: (i, 0, 0)),      # y_
            pl.BlockSpec((bblk, T, C), lambda i: (i, 0, 0)),      # y
            pl.BlockSpec((bblk, T), lambda i: (i, 0)),            # v_stared
            pl.BlockSpec((bblk, T), lambda i: (i, 0)),            # kl_s
            pl.BlockSpec((bblk, C), lambda i: (i, 0)),            # y_T_
            pl.BlockSpec((bblk, C), lambda i: (i, 0)),            # y_T
        ],
        out_specs=pl.BlockSpec((1, 8, 128), lambda i: (i, 0, 0)),
        compiler_params=pltpu.CompilerParams(
            dimension_semantics=("parallel",)),
        cost_estimate=cost,
    )(lam, nday, y_tgt, y_pred, v, kls, yT_tgt, yT_pred)

    # Tiny final reduction over per-block partials (already scaled by -1/B).
    return jnp.sum(partials[:, 0, 0])


def _reference_loss(config, v_stared, y_, y, y_T, y_T_, kl_s,
                    current_step, n_day, phase):
    """Pure-JAX reference mirroring the PyTorch forward exactly."""
    v_aux = config.alpha * v_stared
    likelyhood_aux = jnp.sum(y_ * jnp.log(y), -1)
    if phase == 'train':
        kl_lambda = kl_lambda_annealing(current_step,
                                        config.kl_lambda_start_step,
                                        config.kl_lambda_anneal_rate)
    else:
        kl_lambda = 1.0
    obj_aux = likelyhood_aux - kl_lambda * kl_s
    likelyhood_T = jnp.sum(jnp.reshape(y_T_, y_T.shape) * jnp.log(y_T + 1e-7), -1)
    kl_T = jnp.take_along_axis(kl_s, (n_day - 1).reshape(-1, 1), axis=1)
    obj_T = likelyhood_T - kl_lambda * jnp.squeeze(kl_T, -1)
    obj = obj_T + jnp.sum(v_aux * obj_aux, -1)
    return jnp.mean(-obj)


if __name__ == "__main__":
    cfg = Config()

    def make_inputs(key, B, T, C):
        ks = jax.random.split(key, 7)
        v_stared = jax.nn.softmax(jax.random.normal(ks[0], (B, T)), axis=-1)
        y = jax.nn.softmax(jax.random.normal(ks[1], (B, T, C)), axis=-1)
        y_ = jax.nn.softmax(4.0 * jax.random.normal(ks[2], (B, T, C)), axis=-1)
        y_T = jax.nn.softmax(jax.random.normal(ks[3], (B, C)), axis=-1)
        y_T_ = jax.nn.softmax(4.0 * jax.random.normal(ks[4], (B, 1, C)), axis=-1)
        kl_s = jnp.abs(jax.random.normal(ks[5], (B, T)))
        n_day = jax.random.randint(ks[6], (B,), 1, T + 1)
        return v_stared, y_, y, y_T, y_T_, kl_s, n_day

    key = jax.random.PRNGKey(0)
    k1, k2 = jax.random.split(key)

    # Primary small case (single batch block).
    B, T, C = 2, 8, 2
    v_stared, y_, y, y_T, y_T_, kl_s, n_day = make_inputs(k1, B, T, C)
    current_step = 500
    loss = calculate_joint_loss(cfg, v_stared, y_, y, y_T, y_T_, kl_s,
                                current_step, n_day, 'train')
    loss = jax.block_until_ready(loss)
    ref = _reference_loss(cfg, v_stared, y_, y, y_T, y_T_, kl_s,
                          current_step, n_day, 'train')
    assert jnp.allclose(loss, ref, rtol=1e-4, atol=1e-5), (loss, ref)

    # Ragged multi-block case: exercises the batch grid, "parallel" axis and
    # the out-of-bounds row masking of the tail block (still tiny shapes).
    B2, T2, C2 = 37, 6, 4
    v2, y2_, y2, yT2, yT2_, kls2, nd2 = make_inputs(k2, B2, T2, C2)
    loss2 = calculate_joint_loss(cfg, v2, y2_, y2, yT2, yT2_, kls2,
                                 123, nd2, 'train', block_b=16)
    loss2 = jax.block_until_ready(loss2)
    ref2 = _reference_loss(cfg, v2, y2_, y2, yT2, yT2_, kls2, 123, nd2, 'train')
    assert jnp.allclose(loss2, ref2, rtol=1e-4, atol=1e-5), (loss2, ref2)

    print("KERNEL_OK")
</pallas_src>

<mosaic_0001>
module attributes {stable_mosaic.version = 11 : i64} {
  func.func @kernel(%arg0: i32, %arg1: memref<1xf32, #tpu.memory_space<smem>>, %arg2: memref<2x1xi32, #tpu.memory_space<vmem>>, %arg3: memref<2x8x2xf32, #tpu.memory_space<vmem>>, %arg4: memref<2x8x2xf32, #tpu.memory_space<vmem>>, %arg5: memref<2x8xf32, #tpu.memory_space<vmem>>, %arg6: memref<2x8xf32, #tpu.memory_space<vmem>>, %arg7: memref<2x2xf32, #tpu.memory_space<vmem>>, %arg8: memref<2x2xf32, #tpu.memory_space<vmem>>, %arg9: memref<1x8x128xf32, #tpu.memory_space<vmem>>) attributes {dimension_semantics = [#tpu.dimension_semantics<parallel>], iteration_bounds = array<i64: 1>, scalar_prefetch = 0 : i64, scratch_operands = 0 : i64, tpu.core_type = #tpu.core_type<tc>, window_params = [{transform_indices = @transform_0, window_bounds = array<i64: 1>}, {transform_indices = @transform_1, window_bounds = array<i64: 2, 1>}, {transform_indices = @transform_2, window_bounds = array<i64: 2, 8, 2>}, {transform_indices = @transform_3, window_bounds = array<i64: 2, 8, 2>}, {transform_indices = @transform_4, window_bounds = array<i64: 2, 8>}, {transform_indices = @transform_5, window_bounds = array<i64: 2, 8>}, {transform_indices = @transform_6, window_bounds = array<i64: 2, 2>}, {transform_indices = @transform_7, window_bounds = array<i64: 2, 2>}, {transform_indices = @transform_8, window_bounds = array<i64: 1, 8, 128>}]} {
    %c0 = arith.constant 0 : index
    %0 = memref.load %arg1[%c0] : memref<1xf32, #tpu.memory_space<smem>>
    %c0_0 = arith.constant 0 : index
    %c0_1 = arith.constant 0 : index
    %1 = vector.load %arg5[%c0_0, %c0_1] : memref<2x8xf32, #tpu.memory_space<vmem>>, vector<2x8xf32>
    %cst = arith.constant 5.000000e-01 : f32
    %2 = vector.broadcast %cst : f32 to vector<2x8xf32>
    %3 = arith.mulf %2, %1 : vector<2x8xf32>
    %c0_2 = arith.constant 0 : index
    %c0_3 = arith.constant 0 : index
    %4 = vector.load %arg6[%c0_2, %c0_3] : memref<2x8xf32, #tpu.memory_space<vmem>>, vector<2x8xf32>
    %5 = tpu.iota {dimensions = array<i32: 1>} : vector<2x8xi32>
    %c0_4 = arith.constant 0 : index
    %c0_5 = arith.constant 0 : index
    %6 = vector.load %arg2[%c0_4, %c0_5] : memref<2x1xi32, #tpu.memory_space<vmem>>, vector<2x1xi32>
    %c1_i32 = arith.constant 1 : i32
    %7 = vector.broadcast %c1_i32 : i32 to vector<2x1xi32>
    %8 = arith.subi %6, %7 : vector<2x1xi32>
    %9 = vector.broadcast %8 : vector<2x1xi32> to vector<2x8xi32>
    %10 = arith.cmpi eq, %5, %9 : vector<2x8xi32>
    %11 = arith.extui %10 : vector<2x8xi1> to vector<2x8xi32>
    %12 = arith.sitofp %11 : vector<2x8xi32> to vector<2x8xf32>
    %13 = vector.shape_cast %3 : vector<2x8xf32> to vector<2x8x1xf32>
    %c0_6 = arith.constant 0 : index
    %c0_7 = arith.constant 0 : index
    %c0_8 = arith.constant 0 : index
    %14 = vector.load %arg3[%c0_6, %c0_7, %c0_8] : memref<2x8x2xf32, #tpu.memory_space<vmem>>, vector<2x8x2xf32>
    %c0_9 = arith.constant 0 : index
    %c0_10 = arith.constant 0 : index
    %c0_11 = arith.constant 0 : index
    %15 = vector.load %arg4[%c0_9, %c0_10, %c0_11] : memref<2x8x2xf32, #tpu.memory_space<vmem>>, vector<2x8x2xf32>
    %16 = math.log %15 : vector<2x8x2xf32>
    %17 = arith.mulf %14, %16 : vector<2x8x2xf32>
    %18 = vector.broadcast %13 : vector<2x8x1xf32> to vector<2x8x2xf32>
    %19 = arith.mulf %18, %17 : vector<2x8x2xf32>
    %20 = arith.addf %3, %12 : vector<2x8xf32>
    %21 = arith.mulf %20, %4 : vector<2x8xf32>
    %c0_12 = arith.constant 0 : index
    %c0_13 = arith.constant 0 : index
    %22 = vector.load %arg7[%c0_12, %c0_13] : memref<2x2xf32, #tpu.memory_space<vmem>>, vector<2x2xf32>
    %c0_14 = arith.constant 0 : index
    %c0_15 = arith.constant 0 : index
    %23 = vector.load %arg8[%c0_14, %c0_15] : memref<2x2xf32, #tpu.memory_space<vmem>>, vector<2x2xf32>
    %cst_16 = arith.constant 1.000000e-07 : f32
    %24 = vector.broadcast %cst_16 : f32 to vector<2x2xf32>
    %25 = arith.addf %23, %24 : vector<2x2xf32>
    %26 = math.log %25 : vector<2x2xf32>
    %27 = arith.mulf %22, %26 : vector<2x2xf32>
    %28 = vector.shape_cast %19 : vector<2x8x2xf32> to vector<1x2x8x2xf32>
    %cst_17 = arith.constant dense<0.000000e+00> : vector<1xf32>
    %29 = vector.multi_reduction <add>, %28, %cst_17 [1, 2, 3] : vector<1x2x8x2xf32> to vector<1xf32>
    %30 = vector.shape_cast %29 : vector<1xf32> to vector<1x1x1x1xf32>
    %31 = vector.extract %30[0, 0, 0, 0] : f32 from vector<1x1x1x1xf32>
    %32 = vector.shape_cast %21 : vector<2x8xf32> to vector<1x2x8xf32>
    %cst_18 = arith.constant dense<0.000000e+00> : vector<1xf32>
    %33 = vector.multi_reduction <add>, %32, %cst_18 [1, 2] : vector<1x2x8xf32> to vector<1xf32>
    %34 = vector.shape_cast %33 : vector<1xf32> to vector<1x1x1xf32>
    %35 = vector.extract %34[0, 0, 0] : f32 from vector<1x1x1xf32>
    %36 = arith.mulf %0, %35 : f32
    %37 = arith.subf %31, %36 : f32
    %38 = vector.shape_cast %27 : vector<2x2xf32> to vector<1x2x2xf32>
    %cst_19 = arith.constant dense<0.000000e+00> : vector<1xf32>
    %39 = vector.multi_reduction <add>, %38, %cst_19 [1, 2] : vector<1x2x2xf32> to vector<1xf32>
    %40 = vector.shape_cast %39 : vector<1xf32> to vector<1x1x1xf32>
    %41 = vector.extract %40[0, 0, 0] : f32 from vector<1x1x1xf32>
    %42 = arith.addf %37, %41 : f32
    %cst_20 = arith.constant -5.000000e-01 : f32
    %43 = arith.mulf %42, %cst_20 : f32
    %44 = vector.broadcast %43 : f32 to vector<1x8x128xf32>
    %c0_21 = arith.constant 0 : index
    %c0_22 = arith.constant 0 : index
    %c0_23 = arith.constant 0 : index
    %45 = vector.load %arg9[%c0_21, %c0_22, %c0_23] : memref<1x8x128xf32, #tpu.memory_space<vmem>>, vector<1x8x128xf32>
    tpu.vector_store %arg9[%c0_21, %c0_22, %c0_23], %44 {strides = array<i32>} : memref<1x8x128xf32, #tpu.memory_space<vmem>>, vector<1x8x128xf32>,
    return
  }
  func.func @transform_0(%arg0: i32) -> i32 {
    %c0_i32 = arith.constant 0 : i32
    %c0_i32_0 = arith.constant 0 : i32
    return %c0_i32 : i32
  }
  func.func @transform_1(%arg0: i32) -> (i32, i32) {
    %c0_i32 = arith.constant 0 : i32
    %c0_i32_0 = arith.constant 0 : i32
    return %arg0, %c0_i32 : i32, i32
  }
  func.func @transform_2(%arg0: i32) -> (i32, i32, i32) {
    %c0_i32 = arith.constant 0 : i32
    %c0_i32_0 = arith.constant 0 : i32
    %c0_i32_1 = arith.constant 0 : i32
    return %arg0, %c0_i32, %c0_i32_0 : i32, i32, i32
  }
  func.func @transform_3(%arg0: i32) -> (i32, i32, i32) {
    %c0_i32 = arith.constant 0 : i32
    %c0_i32_0 = arith.constant 0 : i32
    %c0_i32_1 = arith.constant 0 : i32
    return %arg0, %c0_i32, %c0_i32_0 : i32, i32, i32
  }
  func.func @transform_4(%arg0: i32) -> (i32, i32) {
    %c0_i32 = arith.constant 0 : i32
    %c0_i32_0 = arith.constant 0 : i32
    return %arg0, %c0_i32 : i32, i32
  }
  func.func @transform_5(%arg0: i32) -> (i32, i32) {
    %c0_i32 = arith.constant 0 : i32
    %c0_i32_0 = arith.constant 0 : i32
    return %arg0, %c0_i32 : i32, i32
  }
  func.func @transform_6(%arg0: i32) -> (i32, i32) {
    %c0_i32 = arith.constant 0 : i32
    %c0_i32_0 = arith.constant 0 : i32
    return %arg0, %c0_i32 : i32, i32
  }
  func.func @transform_7(%arg0: i32) -> (i32, i32) {
    %c0_i32 = arith.constant 0 : i32
    %c0_i32_0 = arith.constant 0 : i32
    return %arg0, %c0_i32 : i32, i32
  }
  func.func @transform_8(%arg0: i32) -> (i32, i32, i32) {
    %c0_i32 = arith.constant 0 : i32
    %c0_i32_0 = arith.constant 0 : i32
    %c0_i32_1 = arith.constant 0 : i32
    return %arg0, %c0_i32, %c0_i32_0 : i32, i32, i32
  }
}

</mosaic_0001>

<llo_original>
// kernel: tpu_custom_call.1
$region0: #{tpu_custom_call.1}
  #allocation0 [shape = 'u32[]', space=smem, size = 0x4, offset = 0x4, fixed_abs, tag = 'smem constant byte address 0x4 - core index']
  #allocation1 [shape = 'u32[144,128]{1,0:T(1,128)}', space=vmem, size = 0x12000, scoped, tag = 'internal scratch']
  #allocation2 [shape = 'f32[1]{0:T(128)S(6)}', space=smem, size = 0x200, scoped, tag = 'scoped memory for tpu_custom_call.1']
  %s0 = inlined_call_operand.<no memory space> [shape: f32[1], index: 0, kind: input, shape index: {}]
  %s1 = inlined_call_operand.vmem [shape: s32[2,1], index: 1, kind: input, shape index: {}]
  %s2 = inlined_call_operand.vmem [shape: f32[2,8,2], index: 2, kind: input, shape index: {}]
  %s3 = inlined_call_operand.vmem [shape: f32[2,8,2], index: 3, kind: input, shape index: {}]
  %s4 = inlined_call_operand.vmem [shape: f32[2,8], index: 4, kind: input, shape index: {}]
  %s5 = inlined_call_operand.vmem [shape: f32[2,8], index: 5, kind: input, shape index: {}]
  %s6 = inlined_call_operand.vmem [shape: f32[2,2], index: 6, kind: input, shape index: {}]
  %s7 = inlined_call_operand.vmem [shape: f32[2,2], index: 7, kind: input, shape index: {}]
  %s8 = inlined_call_operand.hbm [shape: f32[1,8,128], index: 8, kind: output, shape index: {}]
  %s9 = sld [smem:[#allocation0]]
  $region42: #{tpu_custom_call.1} parent=0
    _
  %s11 = ssub.s32 1, %s9
  %s12 = scalar_select 0, %s11, %s9
  %13 = sst [smem:[#allocation2]] %s0
  $region1: #{tpu_custom_call.1} parent=0
    #allocation3 [shape = 'u8[4096]{0}', space=vmem, size = 0x1000, scoped, tag = 'output window, operand 0, single buffered']
    #allocation4 [shape = 's32[1]{0}', space=sflag, size = 0x4, scoped, tag = 'scoped memory for tpu_custom_call.1']
    %14 = vsyncpa [#allocation4], 0
    // Predicated region
    $region2: #{tpu_custom_call.1} parent=1 // pred_check
      _
    $region3: #{tpu_custom_call.1} parent=1 // pred_check_branch
      %16 = sbr.rel (0) target = $region5
    $region4: #{tpu_custom_call.1} parent=1 // pred_region
      _
    $region5: #{tpu_custom_call.1} parent=1 // pred_fallthru
      _
    // Predicated region
    $region6: #{tpu_custom_call.1} parent=1 // pred_check
      _
    $region7: #{tpu_custom_call.1} parent=1 // pred_check_branch
      %18 = sbr.rel (0) target = $region9
    $region8: #{tpu_custom_call.1} parent=1 // pred_region
      _
    $region9: #{tpu_custom_call.1} parent=1 // pred_fallthru
      _
    // Predicated region
    $region10: #{tpu_custom_call.1} parent=1 // pred_check
      _
    $region11: #{tpu_custom_call.1} parent=1 // pred_check_branch
      %20 = sbr.rel (0) target = $region13
    $region12: #{tpu_custom_call.1} parent=1 // pred_region
      _
    $region13: #{tpu_custom_call.1} parent=1 // pred_fallthru
      _
    // Predicated region
    $region14: #{tpu_custom_call.1} parent=1 // pred_check
      _
    $region15: #{tpu_custom_call.1} parent=1 // pred_check_branch
      %22 = sbr.rel (0) target = $region17
    $region16: #{tpu_custom_call.1} parent=1 // pred_region
      _
    $region17: #{tpu_custom_call.1} parent=1 // pred_fallthru
      _
    // Predicated region
    $region18: #{tpu_custom_call.1} parent=1 // pred_check
      _
    $region19: #{tpu_custom_call.1} parent=1 // pred_check_branch
      %24 = sbr.rel (0) target = $region21
    $region20: #{tpu_custom_call.1} parent=1 // pred_region
      _
    $region21: #{tpu_custom_call.1} parent=1 // pred_fallthru
      _
    // Predicated region
    $region22: #{tpu_custom_call.1} parent=1 // pred_check
      _
    $region23: #{tpu_custom_call.1} parent=1 // pred_check_branch
      %26 = sbr.rel (0) target = $region25
    $region24: #{tpu_custom_call.1} parent=1 // pred_region
      _
    $region25: #{tpu_custom_call.1} parent=1 // pred_fallthru
      _
    // Predicated region
    $region26: #{tpu_custom_call.1} parent=1 // pred_check
      _
    $region27: #{tpu_custom_call.1} parent=1 // pred_check_branch
      %28 = sbr.rel (0) target = $region29
    $region28: #{tpu_custom_call.1} parent=1 // pred_region
      _
    $region29: #{tpu_custom_call.1} parent=1 // pred_fallthru
      _
    // Predicated region
    $region30: #{tpu_custom_call.1} parent=1 // pred_check
      _
    $region31: #{tpu_custom_call.1} parent=1 // pred_check_branch
      %30 = sbr.rel (0) target = $region33
    $region32: #{tpu_custom_call.1} parent=1 // pred_region
      _
    $region33: #{tpu_custom_call.1} parent=1 // pred_fallthru
      _
    %s31 = sld [smem:[#allocation2]]
    %v32 = vld [vmem:[%s4] sm:$0x3]
    %v33 = vmul.f32 %v32, 0.5
    %v34 = vld [vmem:[%s5] sm:$0x3]
    %v35 = vlaneseq
    %v36 = vand.u32 %v35, 127
    %v37 = vld [vmem:[%s1] sm:$0x3]
    %v38 = vsub.s32 %v37, 1
    %39 = vset.pattern.permute.xlu0 0
    %40 = vperm.xlu0 %39, %v38
    %v41 = vpop.permute.xlu0 %40
    %vm42 = vcmp.eq.s32.totalorder %v36, %v41
    %v43 = vsel %vm42, 1, 0
    %v44 = vcvt.s32.f32 %v43
    %v45 = vlaneseq
    %v46 = vshrl.u32 %v45, 7
    %v47 = vsub.s32 0, %v46
    %v48 = vrot.slane %v33, %v47
    %50 = vbcast.lane.b32.xlu0 %v48, 256
    %v51 = vpop.permute.xlu0 %50
    %v52 = vlaneseq
    %v53 = vshrl.u32 %v52, 7
    %v54 = vsub.s32 1, %v53
    %v55 = vrot.slane %v33, %v54
    %57 = vbcast.lane.b32.xlu0 %v55, 256
    %v58 = vpop.permute.xlu0 %57
    %v59 = vld [vmem:[%s2] sm:$0xff]
    %v60 = vld [vmem:[%s2 + $0x8] sm:$0xff]
    %v61 = vld [vmem:[%s3] sm:$0xff]
    %v62 = vld [vmem:[%s3 + $0x8] sm:$0xff]
    %v63 = vlog2.pop %v61
    %v64 = vmul.f32 %v63, 0.6931472
    %v65 = vlog2.pop %v62
    %v66 = vmul.f32 %v65, 0.6931472
    %v67 = vmul.f32 %v59, %v64
    %v68 = vmul.f32 %v60, %v66
    %v69 = vmul.f32 %v51, %v67
    %v70 = vmul.f32 %v58, %v68
    %v71 = vadd.f32 %v33, %v44
    %v72 = vmul.f32 %v71, %v34
    %v73 = vld [vmem:[%s6] sm:$0x3]
    %v74 = vld [vmem:[%s7] sm:$0x3]
    %v75 = vadd.f32 %v74, 1e-07
    %v76 = vlog2.pop %v75
    %v77 = vmul.f32 %v76, 0.6931472
    %v78 = vmul.f32 %v73, %v77
    %vm79 = vcmask 15360
    %v80 = vsel %vm79, %v69, 0.0
    %v81 = vsel %vm79, %v70, 0.0
    %v82 = vadd.f32 %v80, %v81
    %83 = vadd.xlane.f32.xlu0 %v82
    %v84 = vpop.xlane.xlu0 %83
    %v85 = vrot.slane %v84, 4
    %v86 = vadd.f32 %v84, %v85
    %v87 = vrot.slane %v86, 2
    %v88 = vadd.f32 %v86, %v87
    %v89 = vrot.slane %v88, 1
    %v90 = vadd.f32 %v88, %v89
    %s91 = vtos %v90
    %vm92 = vcmask 58368
    %v93 = vsel %vm92, %v72, 0.0
    %94 = vadd.xlane.f32.xlu0 %v93
    %v95 = vpop.xlane.xlu0 %94
    %v96 = vrot.slane %v95, 4
    %v97 = vadd.f32 %v95, %v96
    %v98 = vrot.slane %v97, 2
    %v99 = vadd.f32 %v97, %v98
    %v100 = vrot.slane %v99, 1
    %v101 = vadd.f32 %v99, %v100
    %s102 = vtos %v101
    %s103 = smul.f32 %s31, %s102
    %s104 = ssub.f32 %s91, %s103
    %vm105 = vcmask 9216
    %v106 = vsel %vm105, %v78, 0.0
    %107 = vadd.xlane.f32.xlu0 %v106
    %v108 = vpop.xlane.xlu0 %107
    %v109 = vrot.slane %v108, 4
    %v110 = vadd.f32 %v108, %v109
    %v111 = vrot.slane %v110, 2
    %v112 = vadd.f32 %v110, %v111
    %v113 = vrot.slane %v112, 1
    %v114 = vadd.f32 %v112, %v113
    %s115 = vtos %v114
    %s116 = sadd.f32 %s104, %s115
    %s117 = smul.f32 %s116, -0.5
    %v118 = vstv %s117
    %119 = vst [vmem:[#allocation3] sm:$0xff] %v118
    // Predicated region
    $region34: #{tpu_custom_call.1} parent=1 // pred_check
      _
    $region35: #{tpu_custom_call.1} parent=1 // pred_check_branch
      %121 = sbr.rel (0) target = $region37
    $region36: #{tpu_custom_call.1} parent=1 // pred_region
      %s123 = ssub.s32 128, 128
      %124 = vsyncadd [#allocation4], %s123
      %s126 = sshll.u32 [#allocation3], 4
      %s127 = int_to_ptr.vmem [resolvable:$true] %s126
      %129 = dma.vmem_to_hbm [thread:$0]  %s127, 128, %s8, [#allocation4]
    $region37: #{tpu_custom_call.1} parent=1 // pred_fallthru
      _
    // Predicated region
    $region38: #{tpu_custom_call.1} parent=1 // pred_check
      _
    $region39: #{tpu_custom_call.1} parent=1 // pred_check_branch
      %131 = sbr.rel (0) target = $region41
    $region40: #{tpu_custom_call.1} parent=1 // pred_region
      %132 = dma.done [#allocation4], 128
    $region41: #{tpu_custom_call.1} parent=1 // pred_fallthru
      _
    %133 = vsyncpa [#allocation4], 1

</llo_original>
